<compile_context>
chip_gen: v6e
topology: v6e:2x2x1
jax: 0.10.0
libtpu: 0.0.40
codegen_flags: <defaults>
</compile_context>

<pallas_src>
import jax
import jax.numpy as jnp
from jax.experimental import pallas as pl
from jax.experimental.pallas import tpu as pltpu

IN_DIM = 512
OUT_DIM = 512


def cond_net_kernel(alpha_ref, x_ref, w_ref, b_ref, o_ref):
    # alpha_ref: SMEM (1,) scalar prefetch
    # x_ref: (tb, 512) f32   -> cast to bf16 in-register for the MXU
    # w_ref: (512, tn) bf16, b_ref: (1, tn) f32
    # o_ref: (tb, tn) out_dtype
    x_bf = x_ref[...].astype(jnp.bfloat16)
    y = jnp.dot(x_bf, w_ref[...], preferred_element_type=jnp.float32)
    y = y + b_ref[...]                        # bias broadcast over rows (f32)
    alpha = alpha_ref[0]
    o_ref[...] = jnp.where(y >= 0.0, y, alpha * y).astype(o_ref.dtype)


def prepare_params(w_t, b, alpha):
    """One-time conversion of f32 params to the kernel's storage formats.
    Call ONCE and reuse across forward calls (avoids per-call weight cast)."""
    w_bf = w_t.astype(jnp.bfloat16)                      # [in, out] bf16
    b_row = b.reshape(1, OUT_DIM).astype(jnp.float32)    # [1, out] f32
    alpha_arr = jnp.asarray([alpha], dtype=jnp.float32)  # (1,) f32 for SMEM
    return w_bf, b_row, alpha_arr


def cond_net_forward(x, w_bf, b_row, alpha_arr, *, tb=512, out_dtype=jnp.float32):
    """x: [B, 512] f32, w_bf: [512, 512] bf16 (already [in, out]),
    b_row: [1, 512] f32, alpha_arr: (1,) f32.
    Returns [B, 512] out_dtype = PReLU(x @ W_t + b)."""
    B, D = x.shape
    assert D == IN_DIM and w_bf.shape == (IN_DIM, OUT_DIM)
    assert w_bf.dtype == jnp.bfloat16

    # Batch tile: small batches run as one full-extent block (always layout
    # legal, no padding/slicing); large batches stream tb-row tiles, ragged
    # last block is masked by Pallas on write.
    if B <= tb:
        tb_eff = B
    else:
        tb_eff = tb                 # multiple of 8 (f32 sublane constraint)
    grid_b = pl.cdiv(B, tb_eff)

    # Small-batch latency path: split OUT_DIM so v7x megacore halves the
    # per-core weight DMA. Large batches keep the full row (lane-dense stores,
    # single weight buffer).
    small_batch = B <= 64
    tn = 256 if small_batch else OUT_DIM
    grid_n = OUT_DIM // tn

    if grid_n == 1:
        # Constant index_map across the whole grid -> single-buffer W and b.
        w_spec = pl.BlockSpec((IN_DIM, tn), lambda i, j, a: (0, 0),
                              pipeline_mode=pl.Buffered(1))
        b_spec = pl.BlockSpec((1, tn), lambda i, j, a: (0, 0),
                              pipeline_mode=pl.Buffered(1))
    else:
        # Weight/bias blocks vary with j -> default double-buffering.
        w_spec = pl.BlockSpec((IN_DIM, tn), lambda i, j, a: (0, j))
        b_spec = pl.BlockSpec((1, tn), lambda i, j, a: (0, j))

    grid_spec = pltpu.PrefetchScalarGridSpec(
        num_scalar_prefetch=1,                              # alpha -> SMEM
        grid=(grid_b, grid_n),
        in_specs=[
            pl.BlockSpec((tb_eff, IN_DIM), lambda i, j, a: (i, 0)),  # f32 x tile
            w_spec,
            b_spec,
        ],
        out_specs=pl.BlockSpec((tb_eff, tn), lambda i, j, a: (i, j)),
    )

    out_itemsize = jnp.dtype(out_dtype).itemsize
    cost = pl.CostEstimate(
        flops=2 * B * IN_DIM * OUT_DIM,
        transcendentals=0,
        bytes_accessed=(B * IN_DIM * 4          # f32 activations in
                        + IN_DIM * OUT_DIM * 2  # bf16 weight
                        + OUT_DIM * 4           # f32 bias
                        + B * OUT_DIM * out_itemsize),
    )

    out = pl.pallas_call(
        cond_net_kernel,
        out_shape=jax.ShapeDtypeStruct((B, OUT_DIM), out_dtype),
        grid_spec=grid_spec,
        compiler_params=pltpu.CompilerParams(
            dimension_semantics=("parallel", "parallel")),
        cost_estimate=cost,
    )(alpha_arr, x, w_bf, b_row)

    return out


def init_params(key):
    """Deterministic init matching PyTorch defaults for Linear + PReLU."""
    kw, kb = jax.random.split(key)
    bound = 1.0 / jnp.sqrt(jnp.float32(IN_DIM))
    # PyTorch Linear weight is [out, in]; sample then transpose to [in, out].
    w = jax.random.uniform(kw, (OUT_DIM, IN_DIM), jnp.float32, -bound, bound)
    b = jax.random.uniform(kb, (OUT_DIM,), jnp.float32, -bound, bound)
    alpha = jnp.float32(0.25)                # nn.PReLU() default init
    return w.T, b, alpha


if __name__ == "__main__":
    key = jax.random.PRNGKey(0)
    k_x, k_p = jax.random.split(key)

    B = 8                                    # small batch of speech embeddings
    x = jax.random.normal(k_x, (B, IN_DIM), dtype=jnp.float32)
    w_t, b, alpha = init_params(k_p)
    w_bf, b_row, alpha_arr = prepare_params(w_t, b, alpha)   # one-time cast

    out = cond_net_forward(x, w_bf, b_row, alpha_arr)
    out = jax.block_until_ready(out)
    assert out.shape == (B, OUT_DIM)
    assert out.dtype == jnp.float32

    # Matched-precision reference (bf16 matmul, f32 accumulate + epilogue).
    ref_bf = jnp.dot(x.astype(jnp.bfloat16), w_bf,
                     preferred_element_type=jnp.float32) + b
    ref_bf = jnp.where(ref_bf >= 0.0, ref_bf, alpha * ref_bf)
    assert jnp.allclose(out, ref_bf, atol=1e-3, rtol=1e-3)

    # Full-precision reference (looser tolerance for the bf16 matmul path).
    ref = x @ w_t + b
    ref = jnp.where(ref >= 0.0, ref, alpha * ref)
    assert jnp.allclose(out, ref, atol=3e-2, rtol=3e-2)

    print("KERNEL_OK")
</pallas_src>

<mosaic_0001>
module attributes {stable_mosaic.version = 11 : i64} {
  func.func @cond_net_kernel(%arg0: i32, %arg1: i32, %arg2: memref<1xf32, #tpu.memory_space<smem>>, %arg3: memref<8x512xf32, #tpu.memory_space<vmem>>, %arg4: memref<512x256xbf16, #tpu.memory_space<vmem>>, %arg5: memref<1x256xf32, #tpu.memory_space<vmem>>, %arg6: memref<8x256xf32, #tpu.memory_space<vmem>>) attributes {dimension_semantics = [#tpu.dimension_semantics<parallel>, #tpu.dimension_semantics<parallel>], iteration_bounds = array<i64: 1, 2>, scalar_prefetch = 1 : i64, scratch_operands = 0 : i64, tpu.core_type = #tpu.core_type<tc>, window_params = [{transform_indices = @transform_0, window_bounds = array<i64: 8, 512>}, {transform_indices = @transform_1, window_bounds = array<i64: 512, 256>}, {transform_indices = @transform_2, window_bounds = array<i64: 1, 256>}, {transform_indices = @transform_3, window_bounds = array<i64: 8, 256>}]} {
    %c0 = arith.constant 0 : index
    %c0_0 = arith.constant 0 : index
    %0 = vector.load %arg3[%c0, %c0_0] : memref<8x512xf32, #tpu.memory_space<vmem>>, vector<8x512xf32>
    %1 = arith.truncf %0 : vector<8x512xf32> to vector<8x512xbf16>
    %c0_1 = arith.constant 0 : index
    %c0_2 = arith.constant 0 : index
    %2 = vector.load %arg4[%c0_1, %c0_2] : memref<512x256xbf16, #tpu.memory_space<vmem>>, vector<512x256xbf16>
    %cst = arith.constant dense<0.000000e+00> : vector<8x256xf32>
    %3 = tpu.matmul %1, %2, %cst {dimension_numbers = #tpu.dot_dimension_numbers<[1], [0], [0], [1], [0, 0, 1, 1], [], []>} : vector<8x512xbf16>, vector<512x256xbf16>, vector<8x256xf32> -> vector<8x256xf32>
    %c0_3 = arith.constant 0 : index
    %c0_4 = arith.constant 0 : index
    %4 = vector.load %arg5[%c0_3, %c0_4] : memref<1x256xf32, #tpu.memory_space<vmem>>, vector<1x256xf32>
    %5 = vector.broadcast %4 : vector<1x256xf32> to vector<8x256xf32>
    %6 = arith.addf %3, %5 : vector<8x256xf32>
    %c0_5 = arith.constant 0 : index
    %7 = memref.load %arg2[%c0_5] : memref<1xf32, #tpu.memory_space<smem>>
    %cst_6 = arith.constant 0.000000e+00 : f32
    %8 = vector.broadcast %cst_6 : f32 to vector<8x256xf32>
    %9 = arith.cmpf oge, %6, %8 : vector<8x256xf32>
    %10 = vector.broadcast %7 : f32 to vector<8x256xf32>
    %11 = arith.mulf %10, %6 : vector<8x256xf32>
    %12 = arith.select %9, %6, %11 : vector<8x256xi1>, vector<8x256xf32>
    %c0_7 = arith.constant 0 : index
    %c0_8 = arith.constant 0 : index
    %13 = vector.load %arg6[%c0_7, %c0_8] : memref<8x256xf32, #tpu.memory_space<vmem>>, vector<8x256xf32>
    tpu.vector_store %arg6[%c0_7, %c0_8], %12 {strides = array<i32>} : memref<8x256xf32, #tpu.memory_space<vmem>>, vector<8x256xf32>,
    return
  }
  func.func @transform_0(%arg0: i32, %arg1: i32, %arg2: memref<1xf32, #tpu.memory_space<smem>>) -> (i32, i32) {
    %c0_i32 = arith.constant 0 : i32
    %c0_i32_0 = arith.constant 0 : i32
    return %arg0, %c0_i32 : i32, i32
  }
  func.func @transform_1(%arg0: i32, %arg1: i32, %arg2: memref<1xf32, #tpu.memory_space<smem>>) -> (i32, i32) {
    %c0_i32 = arith.constant 0 : i32
    %c0_i32_0 = arith.constant 0 : i32
    return %c0_i32, %arg1 : i32, i32
  }
  func.func @transform_2(%arg0: i32, %arg1: i32, %arg2: memref<1xf32, #tpu.memory_space<smem>>) -> (i32, i32) {
    %c0_i32 = arith.constant 0 : i32
    %c0_i32_0 = arith.constant 0 : i32
    return %c0_i32, %arg1 : i32, i32
  }
  func.func @transform_3(%arg0: i32, %arg1: i32, %arg2: memref<1xf32, #tpu.memory_space<smem>>) -> (i32, i32) {
    %c0_i32 = arith.constant 0 : i32
    return %arg0, %arg1 : i32, i32
  }
}

</mosaic_0001>

<llo_original>
// kernel: tpu_custom_call.1
$region0: #{tpu_custom_call.1}
  #allocation0 [shape = 'u32[]', space=smem, size = 0x4, offset = 0x4, fixed_abs, tag = 'smem constant byte address 0x4 - core index']
  #allocation1 [shape = 'u32[144,128]{1,0:T(1,128)}', space=vmem, size = 0x12000, scoped, tag = 'internal scratch']
  #allocation2 [shape = 's32[1]{0}', space=sflag, size = 0x4, scoped, tag = 'scoped memory for tpu_custom_call.1']
  #allocation3 [shape = 'f32[1]{0:T(128)S(6)}', space=smem, size = 0x200, scoped, tag = 'prefetched SMEM operand 0']
  %s0 = inlined_call_operand.<no memory space> [shape: f32[1], index: 0, kind: input, shape index: {}]
  %s1 = inlined_call_operand.hbm [shape: f32[8,512], index: 1, kind: input, shape index: {}]
  %s2 = inlined_call_operand.hbm [shape: bf16[512,512], index: 2, kind: input, shape index: {}]
  %s3 = inlined_call_operand.vmem [shape: f32[1,512], index: 3, kind: input, shape index: {}]
  %s4 = inlined_call_operand.hbm [shape: f32[8,512], index: 4, kind: output, shape index: {}]
  %s5 = sld [smem:[#allocation0]]
  $region53: #{tpu_custom_call.1} parent=0
    _
  %s7 = ssub.s32 1, %s5
  %s8 = scalar_select 0, %s7, %s5
  %9 = sst [smem:[#allocation3]] %s0
  $region1: #{tpu_custom_call.1} parent=0
    #allocation4 [shape = 'u8[16384]{0}', space=vmem, size = 0x4000, scoped, tag = 'input window, operand 1, single buffered']
    #allocation5 [shape = 's32[2]{0}', space=sflag, size = 0x8, scoped, tag = 'scoped memory for tpu_custom_call.1']
    #allocation6 [shape = 's32[2]{0}', space=sflag, size = 0x8, scoped, tag = 'scoped memory for tpu_custom_call.1']
    #allocation7 [shape = 'u8[524288]{0}', space=vmem, size = 0x80000, scoped, tag = 'input window, operand 2']
    #allocation8 [shape = 's32[2]{0}', space=sflag, size = 0x8, scoped, tag = 'scoped memory for tpu_custom_call.1']
    #allocation9 [shape = 'u8[16384]{0}', space=vmem, size = 0x4000, scoped, tag = 'output window, operand 0']
    %10 = vsyncpa [#allocation5], 0
    %11 = vsyncpa [#allocation8], 0
    %s12 = scalar_lea.sflag [#allocation8], 1
    %13 = vsyncpa %s12, 0
    %14 = vsyncpa [#allocation6], 0
    %s15 = scalar_lea.sflag [#allocation6], 1
    %16 = vsyncpa %s15, 0
    loop: start=0, step=1, limit=4
    $region2: #{tpu_custom_call.1} parent=1 // loop_pre_header
      _
    $region3: #{tpu_custom_call.1} parent=1 // loop_header
      %s18 = sphi 0, %s22
      %p19 = scmp.ge.s32.totalorder %s18, 4
      %s25 = sphi 0, %s37
      %s26 = sphi 0, %s33
      %s27 = sphi 0, %s25
      %s28 = sphi 0, %s26
      %s29 = sphi 0, %s27
      %s30 = sphi 0, %s28
      %s40 = sphi 0, %s42
      %s43 = sphi 0, %s40
      %s44 = sphi 0, %s43
      %s60 = sphi 0, %s44
      %s66 = sphi 0, %s68
      %s69 = sphi 0, %s66
      %s70 = sphi 0, %s69
      %s86 = sphi 0, %s70
      %s92 = sphi 0, %s94
      %s95 = sphi 0, %s92
      %s96 = sphi 0, %s95
      %s112 = sphi 0, %s96
      %s120 = sphi 0, %s122
      %s123 = sphi 0, %s120
      %s124 = sphi 0, %s123
      %s140 = sphi 0, %s124
    $region4: #{tpu_custom_call.1} parent=1 // loop_header_branch
      %21 = sbr.rel (%p19) target = $region8
    $region5: #{tpu_custom_call.1} parent=1 // loop_body
      %s23 = ssub.s32 %s18, 1
      %s24 = ssub.s32 %s18, 2
      %s31 = sadd.s32 1, %s26
      %p32 = scmp.ge.s32.totalorder %s31, 2
      %s33 = scalar_select %p32, 0, %s31
      %s34 = sadd.s32 1, %s25
      %s35 = scalar_select %p32, %s34, %s25
      %p36 = scmp.ge.s32.totalorder %s35, 1
      %s37 = scalar_select %p36, 0, %s35
      %s38 = ssub.s32 %s25, %s37
      %p39 = scmp.eq.s32.totalorder %s38, 0
      %s41 = sadd.s32 %s40, 1
      %s42 = scalar_select %p39, %s40, %s41
      %p45 = pneg %p39
      %p46 = scmp.eq.s32.totalorder %s18, 1
      %p47 = por %p45, %p46
      %p48 = scmp.ne.s32.totalorder %s40, %s43
      %p49 = scmp.eq.s32.totalorder %s18, 0
      %p50 = por %p48, %p49
      %p51 = scmp.ne.s32.totalorder %s40, %s43
      %p52 = scmp.eq.s32.totalorder %s23, 1
      %p53 = por %p51, %p52
      %p54 = scmp.ne.s32.totalorder %s43, %s44
      %p55 = scmp.eq.s32.totalorder %s23, 0
      %p56 = por %p54, %p55
      %p57 = scmp.ne.s32.totalorder %s43, %s44
      %p58 = scmp.eq.s32.totalorder %s24, 1
      %p59 = por %p57, %p58
      %p61 = scmp.ne.s32.totalorder %s44, %s60
      %p62 = scmp.eq.s32.totalorder %s24, 0
      %p63 = por %p61, %p62
      %s64 = ssub.s32 %s26, %s33
      %p65 = scmp.eq.s32.totalorder %s64, 0
      %s67 = sadd.s32 %s66, 1
      %s68 = scalar_select %p65, %s66, %s67
      %p71 = pneg %p65
      %p72 = scmp.eq.s32.totalorder %s18, 1
      %p73 = por %p71, %p72
      %p74 = scmp.ne.s32.totalorder %s66, %s69
      %p75 = scmp.eq.s32.totalorder %s18, 0
      %p76 = por %p74, %p75
      %p77 = scmp.ne.s32.totalorder %s66, %s69
      %p78 = scmp.eq.s32.totalorder %s23, 1
      %p79 = por %p77, %p78
      %p80 = scmp.ne.s32.totalorder %s69, %s70
      %p81 = scmp.eq.s32.totalorder %s23, 0
      %p82 = por %p80, %p81
      %p83 = scmp.ne.s32.totalorder %s69, %s70
      %p84 = scmp.eq.s32.totalorder %s24, 1
      %p85 = por %p83, %p84
      %p87 = scmp.ne.s32.totalorder %s70, %s86
      %p88 = scmp.eq.s32.totalorder %s24, 0
      %p89 = por %p87, %p88
      %s90 = ssub.s32 %s26, %s33
      %p91 = scmp.eq.s32.totalorder %s90, 0
      %s93 = sadd.s32 %s92, 1
      %s94 = scalar_select %p91, %s92, %s93
      %p97 = pneg %p91
      %p98 = scmp.eq.s32.totalorder %s18, 1
      %p99 = por %p97, %p98
      %p100 = scmp.ne.s32.totalorder %s92, %s95
      %p101 = scmp.eq.s32.totalorder %s18, 0
      %p102 = por %p100, %p101
      %p103 = scmp.ne.s32.totalorder %s92, %s95
      %p104 = scmp.eq.s32.totalorder %s23, 1
      %p105 = por %p103, %p104
      %p106 = scmp.ne.s32.totalorder %s95, %s96
      %p107 = scmp.eq.s32.totalorder %s23, 0
      %p108 = por %p106, %p107
      %p109 = scmp.ne.s32.totalorder %s95, %s96
      %p110 = scmp.eq.s32.totalorder %s24, 1
      %p111 = por %p109, %p110
      %p113 = scmp.ne.s32.totalorder %s96, %s112
      %p114 = scmp.eq.s32.totalorder %s24, 0
      %p115 = por %p113, %p114
      %s116 = ssub.s32 %s25, %s37
      %s117 = ssub.s32 %s26, %s33
      %s118 = sor.u32 %s116, %s117
      %p119 = scmp.eq.s32.totalorder %s118, 0
      %s121 = sadd.s32 %s120, 1
      %s122 = scalar_select %p119, %s120, %s121
      %p125 = pneg %p119
      %p126 = scmp.eq.s32.totalorder %s18, 1
      %p127 = por %p125, %p126
      %p128 = scmp.ne.s32.totalorder %s120, %s123
      %p129 = scmp.eq.s32.totalorder %s18, 0
      %p130 = por %p128, %p129
      %p131 = scmp.ne.s32.totalorder %s120, %s123
      %p132 = scmp.eq.s32.totalorder %s23, 1
      %p133 = por %p131, %p132
      %p134 = scmp.ne.s32.totalorder %s123, %s124
      %p135 = scmp.eq.s32.totalorder %s23, 0
      %p136 = por %p134, %p135
      %p137 = scmp.ne.s32.totalorder %s123, %s124
      %p138 = scmp.eq.s32.totalorder %s24, 1
      %p139 = por %p137, %p138
      %p141 = scmp.ne.s32.totalorder %s124, %s140
      %p142 = scmp.eq.s32.totalorder %s24, 0
      %p143 = por %p141, %p142
      %p144 = scmp.le.s32.totalorder 1, %s18
      %p145 = scmp.lt.s32.totalorder %s18, 3
      %p146 = pnand %p144, %p145
      %p147 = pneg %p146
      // Predicated region
      $region9: #{tpu_custom_call.1} parent=5 // pred_check
        _
      $region10: #{tpu_custom_call.1} parent=5 // pred_check_branch
        %149 = sbr.rel (%p146) target = $region12
      $region11: #{tpu_custom_call.1} parent=5 // pred_region
        %s150 = ssub.s32 %s18, 1
        // Predicated region
        $region13: #{tpu_custom_call.1} parent=11 // pred_check
          %p151 = pneg %p56
        $region14: #{tpu_custom_call.1} parent=11 // pred_check_branch
          %153 = sbr.rel (%p151) target = $region16
        $region15: #{tpu_custom_call.1} parent=11 // pred_region
          %s155 = ssub.s32 512, 512
          %156 = vsyncadd [#allocation5], %s155
          %s157 = smul.addr %s27, 4
          %s158 = smul.addr %s157, 128
          %s159 = scalar_lea.hbm %s1, %s158
          %s161 = sshll.u32 [#allocation4], 4
          %s162 = int_to_ptr.vmem [resolvable:$true] %s161
          %164 = dma.hbm_to_vmem [thread:$0]  %s159, 512, %s162, [#allocation5]
        $region16: #{tpu_custom_call.1} parent=11 // pred_fallthru
          _
      $region12: #{tpu_custom_call.1} parent=5 // pred_fallthru
        _
      %p165 = scmp.lt.s32.totalorder %s18, 2
      // Predicated region
      $region17: #{tpu_custom_call.1} parent=5 // pred_check
        %p166 = pneg %p165
      $region18: #{tpu_custom_call.1} parent=5 // pred_check_branch
        %168 = sbr.rel (%p166) target = $region20
      $region19: #{tpu_custom_call.1} parent=5 // pred_region
        // Predicated region
        $region21: #{tpu_custom_call.1} parent=19 // pred_check
          %p169 = pneg %p76
        $region22: #{tpu_custom_call.1} parent=19 // pred_check_branch
          %171 = sbr.rel (%p169) target = $region24
        $region23: #{tpu_custom_call.1} parent=19 // pred_region
          %s172 = sand.u32 %s66, 1
          %s173 = scalar_lea.sflag [#allocation8], %s172
          %s174 = sand.u32 %s66, 1
          %s175 = smul.addr %s174, 512
          %s176 = scalar_lea.vmem [#allocation7], %s175
          %s177 = smul.u32 2, %s26
          %s179 = ssub.s32 8192, 8192
          %180 = vsyncadd %s173, %s179
          %s181 = smul.addr %s177, 64
          %s182 = scalar_lea.hbm %s2, %s181
          %s183 = sshll.u32 %s176, 4
          %s184 = int_to_ptr.vmem [resolvable:$true] %s183
          %189 = dma.hbm_to_vmem [thread:$0]  %s182, 8192, %s184, %s173, 256, 128, 8
        $region24: #{tpu_custom_call.1} parent=19 // pred_fallthru
          _
        // Predicated region
        $region25: #{tpu_custom_call.1} parent=19 // pred_check
          %p190 = pneg %p102
        $region26: #{tpu_custom_call.1} parent=19 // pred_check_branch
          %192 = sbr.rel (%p190) target = $region28
        $region27: #{tpu_custom_call.1} parent=19 // pred_region
          %s193 = smul.u32 2, %s26
          %p194 = scmp.lt.s32.totalorder %s193, 3
          %s195 = scalar_select %p194, %s193, 3
          %s196 = scalar_lea.vmem %s3, %s195
          %s197 = smul.u32 2, %s26
        $region28: #{tpu_custom_call.1} parent=19 // pred_fallthru
          _
      $region20: #{tpu_custom_call.1} parent=5 // pred_fallthru
        _
      %p198 = scmp.le.s32.totalorder 1, %s18
      %p199 = scmp.lt.s32.totalorder %s18, 3
      %p200 = pnand %p198, %p199
      %p201 = pneg %p200
      // Predicated region
      $region29: #{tpu_custom_call.1} parent=5 // pred_check
        _
      $region30: #{tpu_custom_call.1} parent=5 // pred_check_branch
        %203 = sbr.rel (%p200) target = $region32
      $region31: #{tpu_custom_call.1} parent=5 // pred_region
        %s204 = ssub.s32 %s18, 1
        // Predicated region
        $region33: #{tpu_custom_call.1} parent=31 // pred_check
          %p205 = pneg %p56
        $region34: #{tpu_custom_call.1} parent=31 // pred_check_branch
          %207 = sbr.rel (%p205) target = $region36
        $region35: #{tpu_custom_call.1} parent=31 // pred_region
          %208 = dma.done [#allocation5], 512
        $region36: #{tpu_custom_call.1} parent=31 // pred_fallthru
          _
        %s209 = sand.u32 %s69, 1
        %s210 = scalar_lea.sflag [#allocation8], %s209
        %s211 = sand.u32 %s69, 1
        %s212 = smul.addr %s211, 512
        %s213 = scalar_lea.vmem [#allocation7], %s212
        // Predicated region
        $region37: #{tpu_custom_call.1} parent=31 // pred_check
          %p214 = pneg %p82
        $region38: #{tpu_custom_call.1} parent=31 // pred_check_branch
          %216 = sbr.rel (%p214) target = $region40
        $region39: #{tpu_custom_call.1} parent=31 // pred_region
          %217 = dma.done %s210, 8192
        $region40: #{tpu_custom_call.1} parent=31 // pred_fallthru
          _
        %p218 = pneg %p56
        %p219 = pneg %p53
        %s220 = sand.u32 %s69, 1
        %s221 = scalar_lea.sflag [#allocation8], %s220
        %s222 = sand.u32 %s69, 1
        %s223 = smul.addr %s222, 512
        %s224 = scalar_lea.vmem [#allocation7], %s223
        %p225 = pneg %p82
        %p226 = pneg %p79
        %s227 = smul.u32 2, %s28
        %p228 = scmp.lt.s32.totalorder %s227, 3
        %s229 = scalar_select %p228, %s227, 3
        %s230 = scalar_lea.vmem %s3, %s229
        %p231 = pneg %p108
        %p232 = pneg %p105
        %p233 = pneg %p136
        %p234 = pneg %p133
        %s235 = sand.u32 %s123, 1
        %s236 = scalar_lea.sflag [#allocation6], %s235
        %s237 = sand.u32 %s123, 1
        %s238 = smul.addr %s237, 16
        %s239 = scalar_lea.vmem [#allocation9], %s238
        %s240 = smul.u32 2, %s28
        %s241 = smul.u32 2, %s28
        %p242 = scmp.lt.s32.totalorder %s241, 3
        %s243 = scalar_select %p242, %s241, 3
        %s244 = scalar_lea.vmem %s3, %s243
        %s245 = smul.u32 2, %s28
        %s246 = smul.u32 2, %s28
        %v247 = vld [vmem:[#allocation4] sm:$0xff]
        %v248 = vld [vmem:[#allocation4 + $0x8] sm:$0xff]
        %v249 = vld [vmem:[#allocation4 + $0x10] sm:$0xff]
        %v250 = vld [vmem:[#allocation4 + $0x18] sm:$0xff]
        %v251 = vpack.c.bf16 %v247, %v247
        %v252 = vpack.c.bf16 %v248, %v248
        %v253 = vpack.c.bf16 %v249, %v249
        %v254 = vpack.c.bf16 %v250, %v250
        %v255 = vld [vmem:[%s213] sm:$0xff]
        %v256 = vld [vmem:[%s213 + $0x8] sm:$0xff]
        %v257 = vld [vmem:[%s213 + $0x10] sm:$0xff]
        %v258 = vld [vmem:[%s213 + $0x18] sm:$0xff]
        %v259 = vld [vmem:[%s213 + $0x20] sm:$0xff]
        %v260 = vld [vmem:[%s213 + $0x28] sm:$0xff]
        %v261 = vld [vmem:[%s213 + $0x30] sm:$0xff]
        %v262 = vld [vmem:[%s213 + $0x38] sm:$0xff]
        %v263 = vld [vmem:[%s213 + $0x40] sm:$0xff]
        %v264 = vld [vmem:[%s213 + $0x48] sm:$0xff]
        %v265 = vld [vmem:[%s213 + $0x50] sm:$0xff]
        %v266 = vld [vmem:[%s213 + $0x58] sm:$0xff]
        %v267 = vld [vmem:[%s213 + $0x60] sm:$0xff]
        %v268 = vld [vmem:[%s213 + $0x68] sm:$0xff]
        %v269 = vld [vmem:[%s213 + $0x70] sm:$0xff]
        %v270 = vld [vmem:[%s213 + $0x78] sm:$0xff]
        %v271 = vld [vmem:[%s213 + $0x80] sm:$0xff]
        %v272 = vld [vmem:[%s213 + $0x88] sm:$0xff]
        %v273 = vld [vmem:[%s213 + $0x90] sm:$0xff]
        %v274 = vld [vmem:[%s213 + $0x98] sm:$0xff]
        %v275 = vld [vmem:[%s213 + $0xa0] sm:$0xff]
        %v276 = vld [vmem:[%s213 + $0xa8] sm:$0xff]
        %v277 = vld [vmem:[%s213 + $0xb0] sm:$0xff]
        %v278 = vld [vmem:[%s213 + $0xb8] sm:$0xff]
        %v279 = vld [vmem:[%s213 + $0xc0] sm:$0xff]
        %v280 = vld [vmem:[%s213 + $0xc8] sm:$0xff]
        %v281 = vld [vmem:[%s213 + $0xd0] sm:$0xff]
        %v282 = vld [vmem:[%s213 + $0xd8] sm:$0xff]
        %v283 = vld [vmem:[%s213 + $0xe0] sm:$0xff]
        %v284 = vld [vmem:[%s213 + $0xe8] sm:$0xff]
        %v285 = vld [vmem:[%s213 + $0xf0] sm:$0xff]
        %v286 = vld [vmem:[%s213 + $0xf8] sm:$0xff]
        %v287 = vld [vmem:[%s213 + $0x100] sm:$0xff]
        %v288 = vld [vmem:[%s213 + $0x108] sm:$0xff]
        %v289 = vld [vmem:[%s213 + $0x110] sm:$0xff]
        %v290 = vld [vmem:[%s213 + $0x118] sm:$0xff]
        %v291 = vld [vmem:[%s213 + $0x120] sm:$0xff]
        %v292 = vld [vmem:[%s213 + $0x128] sm:$0xff]
        %v293 = vld [vmem:[%s213 + $0x130] sm:$0xff]
        %v294 = vld [vmem:[%s213 + $0x138] sm:$0xff]
        %v295 = vld [vmem:[%s213 + $0x140] sm:$0xff]
        %v296 = vld [vmem:[%s213 + $0x148] sm:$0xff]
        %v297 = vld [vmem:[%s213 + $0x150] sm:$0xff]
        %v298 = vld [vmem:[%s213 + $0x158] sm:$0xff]
        %v299 = vld [vmem:[%s213 + $0x160] sm:$0xff]
        %v300 = vld [vmem:[%s213 + $0x168] sm:$0xff]
        %v301 = vld [vmem:[%s213 + $0x170] sm:$0xff]
        %v302 = vld [vmem:[%s213 + $0x178] sm:$0xff]
        %v303 = vld [vmem:[%s213 + $0x180] sm:$0xff]
        %v304 = vld [vmem:[%s213 + $0x188] sm:$0xff]
        %v305 = vld [vmem:[%s213 + $0x190] sm:$0xff]
        %v306 = vld [vmem:[%s213 + $0x198] sm:$0xff]
        %v307 = vld [vmem:[%s213 + $0x1a0] sm:$0xff]
        %v308 = vld [vmem:[%s213 + $0x1a8] sm:$0xff]
        %v309 = vld [vmem:[%s213 + $0x1b0] sm:$0xff]
        %v310 = vld [vmem:[%s213 + $0x1b8] sm:$0xff]
        %v311 = vld [vmem:[%s213 + $0x1c0] sm:$0xff]
        %v312 = vld [vmem:[%s213 + $0x1c8] sm:$0xff]
        %v313 = vld [vmem:[%s213 + $0x1d0] sm:$0xff]
        %v314 = vld [vmem:[%s213 + $0x1d8] sm:$0xff]
        %v315 = vld [vmem:[%s213 + $0x1e0] sm:$0xff]
        %v316 = vld [vmem:[%s213 + $0x1e8] sm:$0xff]
        %v317 = vld [vmem:[%s213 + $0x1f0] sm:$0xff]
        %v318 = vld [vmem:[%s213 + $0x1f8] sm:$0xff]
        %v319 = vld [vmem:[%s244] sm:$0x3]
        %v321 = vlaneseq
        %v322 = vshrl.u32 %v321, 7
        %v323 = vsub.s32 0, %v322
        %v324 = vrot.slane %v319, %v323
        %v325 = vlaneseq
        %v326 = vshrl.u32 %v325, 7
        %v327 = vsub.s32 1, %v326
        %v328 = vrot.slane %v319, %v327
        %v395 = vunpack.c.l.b16 %v255
        %v396 = vunpack.c.h.b16 %v255
        %v397 = vunpack.c.l.b16 %v256
        %v398 = vunpack.c.h.b16 %v256
        %v399 = vunpack.c.l.b16 %v257
        %v400 = vunpack.c.h.b16 %v257
        %v401 = vunpack.c.l.b16 %v258
        %v402 = vunpack.c.h.b16 %v258
        %v403 = vunpack.c.l.b16 %v259
        %v404 = vunpack.c.h.b16 %v259
        %v405 = vunpack.c.l.b16 %v260
        %v406 = vunpack.c.h.b16 %v260
        %v407 = vunpack.c.l.b16 %v261
        %v408 = vunpack.c.h.b16 %v261
        %v409 = vunpack.c.l.b16 %v262
        %v410 = vunpack.c.h.b16 %v262
        %v411 = vunpack.c.l.b16 %v263
        %v412 = vunpack.c.h.b16 %v263
        %v413 = vunpack.c.l.b16 %v264
        %v414 = vunpack.c.h.b16 %v264
        %v415 = vunpack.c.l.b16 %v265
        %v416 = vunpack.c.h.b16 %v265
        %v417 = vunpack.c.l.b16 %v266
        %v418 = vunpack.c.h.b16 %v266
        %v419 = vunpack.c.l.b16 %v267
        %v420 = vunpack.c.h.b16 %v267
        %v421 = vunpack.c.l.b16 %v268
        %v422 = vunpack.c.h.b16 %v268
        %v423 = vunpack.c.l.b16 %v269
        %v424 = vunpack.c.h.b16 %v269
        %v425 = vunpack.c.l.b16 %v270
        %v426 = vunpack.c.h.b16 %v270
        %v427 = vunpack.c.l.b16 %v271
        %v428 = vunpack.c.h.b16 %v271
        %v429 = vunpack.c.l.b16 %v272
        %v430 = vunpack.c.h.b16 %v272
        %v431 = vunpack.c.l.b16 %v273
        %v432 = vunpack.c.h.b16 %v273
        %v433 = vunpack.c.l.b16 %v274
        %v434 = vunpack.c.h.b16 %v274
        %v435 = vunpack.c.l.b16 %v275
        %v436 = vunpack.c.h.b16 %v275
        %v437 = vunpack.c.l.b16 %v276
        %v438 = vunpack.c.h.b16 %v276
        %v439 = vunpack.c.l.b16 %v277
        %v440 = vunpack.c.h.b16 %v277
        %v441 = vunpack.c.l.b16 %v278
        %v442 = vunpack.c.h.b16 %v278
        %v443 = vunpack.c.l.b16 %v279
        %v444 = vunpack.c.h.b16 %v279
        %v445 = vunpack.c.l.b16 %v280
        %v446 = vunpack.c.h.b16 %v280
        %v447 = vunpack.c.l.b16 %v281
        %v448 = vunpack.c.h.b16 %v281
        %v449 = vunpack.c.l.b16 %v282
        %v450 = vunpack.c.h.b16 %v282
        %v451 = vunpack.c.l.b16 %v283
        %v452 = vunpack.c.h.b16 %v283
        %v453 = vunpack.c.l.b16 %v284
        %v454 = vunpack.c.h.b16 %v284
        %v455 = vunpack.c.l.b16 %v285
        %v456 = vunpack.c.h.b16 %v285
        %v457 = vunpack.c.l.b16 %v286
        %v458 = vunpack.c.h.b16 %v286
        %v459 = vunpack.c.l.b16 %v287
        %v460 = vunpack.c.h.b16 %v287
        %v461 = vunpack.c.l.b16 %v288
        %v462 = vunpack.c.h.b16 %v288
        %v463 = vunpack.c.l.b16 %v289
        %v464 = vunpack.c.h.b16 %v289
        %v465 = vunpack.c.l.b16 %v290
        %v466 = vunpack.c.h.b16 %v290
        %v467 = vunpack.c.l.b16 %v291
        %v468 = vunpack.c.h.b16 %v291
        %v469 = vunpack.c.l.b16 %v292
        %v470 = vunpack.c.h.b16 %v292
        %v471 = vunpack.c.l.b16 %v293
        %v472 = vunpack.c.h.b16 %v293
        %v473 = vunpack.c.l.b16 %v294
        %v474 = vunpack.c.h.b16 %v294
        %v475 = vunpack.c.l.b16 %v295
        %v476 = vunpack.c.h.b16 %v295
        %v477 = vunpack.c.l.b16 %v296
        %v478 = vunpack.c.h.b16 %v296
        %v479 = vunpack.c.l.b16 %v297
        %v480 = vunpack.c.h.b16 %v297
        %v481 = vunpack.c.l.b16 %v298
        %v482 = vunpack.c.h.b16 %v298
        %v483 = vunpack.c.l.b16 %v299
        %v484 = vunpack.c.h.b16 %v299
        %v485 = vunpack.c.l.b16 %v300
        %v486 = vunpack.c.h.b16 %v300
        %v487 = vunpack.c.l.b16 %v301
        %v488 = vunpack.c.h.b16 %v301
        %v489 = vunpack.c.l.b16 %v302
        %v490 = vunpack.c.h.b16 %v302
        %v491 = vunpack.c.l.b16 %v303
        %v492 = vunpack.c.h.b16 %v303
        %v493 = vunpack.c.l.b16 %v304
        %v494 = vunpack.c.h.b16 %v304
        %v495 = vunpack.c.l.b16 %v305
        %v496 = vunpack.c.h.b16 %v305
        %v497 = vunpack.c.l.b16 %v306
        %v498 = vunpack.c.h.b16 %v306
        %v499 = vunpack.c.l.b16 %v307
        %v500 = vunpack.c.h.b16 %v307
        %v501 = vunpack.c.l.b16 %v308
        %v502 = vunpack.c.h.b16 %v308
        %v503 = vunpack.c.l.b16 %v309
        %v504 = vunpack.c.h.b16 %v309
        %v505 = vunpack.c.l.b16 %v310
        %v506 = vunpack.c.h.b16 %v310
        %v507 = vunpack.c.l.b16 %v311
        %v508 = vunpack.c.h.b16 %v311
        %v509 = vunpack.c.l.b16 %v312
        %v510 = vunpack.c.h.b16 %v312
        %v511 = vunpack.c.l.b16 %v313
        %v512 = vunpack.c.h.b16 %v313
        %v513 = vunpack.c.l.b16 %v314
        %v514 = vunpack.c.h.b16 %v314
        %v515 = vunpack.c.l.b16 %v315
        %v516 = vunpack.c.h.b16 %v315
        %v517 = vunpack.c.l.b16 %v316
        %v518 = vunpack.c.h.b16 %v316
        %v519 = vunpack.c.l.b16 %v317
        %v520 = vunpack.c.h.b16 %v317
        %v521 = vunpack.c.l.b16 %v318
        %v522 = vunpack.c.h.b16 %v318
        %v523 = vpack.c.b16 %v397, %v395
        %v524 = vpack.c.b16 %v398, %v396
        %v525 = vpack.c.b16 %v401, %v399
        %v526 = vpack.c.b16 %v402, %v400
        %v527 = vpack.c.b16 %v405, %v403
        %v528 = vpack.c.b16 %v406, %v404
        %v529 = vpack.c.b16 %v409, %v407
        %v530 = vpack.c.b16 %v410, %v408
        %v531 = vpack.c.b16 %v413, %v411
        %v532 = vpack.c.b16 %v414, %v412
        %v533 = vpack.c.b16 %v417, %v415
        %v534 = vpack.c.b16 %v418, %v416
        %v535 = vpack.c.b16 %v421, %v419
        %v536 = vpack.c.b16 %v422, %v420
        %v537 = vpack.c.b16 %v425, %v423
        %v538 = vpack.c.b16 %v426, %v424
        %v539 = vpack.c.b16 %v429, %v427
        %v540 = vpack.c.b16 %v430, %v428
        %v541 = vpack.c.b16 %v433, %v431
        %v542 = vpack.c.b16 %v434, %v432
        %v543 = vpack.c.b16 %v437, %v435
        %v544 = vpack.c.b16 %v438, %v436
        %v545 = vpack.c.b16 %v441, %v439
        %v546 = vpack.c.b16 %v442, %v440
        %v547 = vpack.c.b16 %v445, %v443
        %v548 = vpack.c.b16 %v446, %v444
        %v549 = vpack.c.b16 %v449, %v447
        %v550 = vpack.c.b16 %v450, %v448
        %v551 = vpack.c.b16 %v453, %v451
        %v552 = vpack.c.b16 %v454, %v452
        %v553 = vpack.c.b16 %v457, %v455
        %v554 = vpack.c.b16 %v458, %v456
        %v555 = vpack.c.b16 %v461, %v459
        %v556 = vpack.c.b16 %v462, %v460
        %v557 = vpack.c.b16 %v465, %v463
        %v558 = vpack.c.b16 %v466, %v464
        %v559 = vpack.c.b16 %v469, %v467
        %v560 = vpack.c.b16 %v470, %v468
        %v561 = vpack.c.b16 %v473, %v471
        %v562 = vpack.c.b16 %v474, %v472
        %v563 = vpack.c.b16 %v477, %v475
        %v564 = vpack.c.b16 %v478, %v476
        %v565 = vpack.c.b16 %v481, %v479
        %v566 = vpack.c.b16 %v482, %v480
        %v567 = vpack.c.b16 %v485, %v483
        %v568 = vpack.c.b16 %v486, %v484
        %v569 = vpack.c.b16 %v489, %v487
        %v570 = vpack.c.b16 %v490, %v488
        %v571 = vpack.c.b16 %v493, %v491
        %v572 = vpack.c.b16 %v494, %v492
        %v573 = vpack.c.b16 %v497, %v495
        %v574 = vpack.c.b16 %v498, %v496
        %v575 = vpack.c.b16 %v501, %v499
        %v576 = vpack.c.b16 %v502, %v500
        %v577 = vpack.c.b16 %v505, %v503
        %v578 = vpack.c.b16 %v506, %v504
        %v579 = vpack.c.b16 %v509, %v507
        %v580 = vpack.c.b16 %v510, %v508
        %v581 = vpack.c.b16 %v513, %v511
        %v582 = vpack.c.b16 %v514, %v512
        %v583 = vpack.c.b16 %v517, %v515
        %v584 = vpack.c.b16 %v518, %v516
        %v585 = vpack.c.b16 %v521, %v519
        %v586 = vpack.c.b16 %v522, %v520
        %651 = vmatprep.subr.bf16.mxu0 %v538
        %652 = vmatpush1.bf16.msra.mxu0 %v537
        %653 = vmatprep.subr.bf16.mxu0 %v536
        %654 = vmatpush1.bf16.msra.mxu0 %v535
        %655 = vmatprep.subr.bf16.mxu0 %v534
        %656 = vmatpush1.bf16.msra.mxu0 %v533
        %657 = vmatprep.subr.bf16.mxu0 %v532
        %658 = vmatpush1.bf16.msra.mxu0 %v531
        %659 = vmatprep.subr.bf16.mxu0 %v530
        %660 = vmatpush1.bf16.msra.mxu0 %v529
        %661 = vmatprep.subr.bf16.mxu0 %v528
        %662 = vmatpush1.bf16.msra.mxu0 %v527
        %663 = vmatprep.subr.bf16.mxu0 %v526
        %664 = vmatpush1.bf16.msra.mxu0 %v525
        %665 = vmatprep.subr.bf16.mxu0 %v524
        %666 = vmatpush1.bf16.msra.mxu0 %v523
        %667 = vmatprep.subr.bf16.mxu0 %v554
        %668 = vmatpush2.bf16.msra.mxu0 %v553
        %669 = vmatprep.subr.bf16.mxu0 %v552
        %670 = vmatpush2.bf16.msra.mxu0 %v551
        %671 = vmatprep.subr.bf16.mxu0 %v550
        %672 = vmatpush2.bf16.msra.mxu0 %v549
        %673 = vmatprep.subr.bf16.mxu0 %v548
        %674 = vmatpush2.bf16.msra.mxu0 %v547
        %675 = vmatprep.subr.bf16.mxu0 %v546
        %676 = vmatpush2.bf16.msra.mxu0 %v545
        %677 = vmatprep.subr.bf16.mxu0 %v544
        %678 = vmatpush2.bf16.msra.mxu0 %v543
        %679 = vmatprep.subr.bf16.mxu0 %v542
        %680 = vmatpush2.bf16.msra.mxu0 %v541
        %681 = vmatprep.subr.bf16.mxu0 %v540
        %682 = vmatpush2.bf16.msra.mxu0 %v539
        %683 = vmatprep.mubr.bf16.mxu0 %v252
        %684 = vmatmul.mubr.bf16.gmra.mxu0 %v251
        %v685 = vpop.f32.mrf.mxu0
        %v686 = vadd.f32 %v324, %v685
        %v687 = vpop.f32.mrf.mxu0
        %v688 = vadd.f32 %v328, %v687
        %v689 = vpop.f32.mrf.mxu0
        %v690 = vpop.f32.mrf.mxu0
        %691 = vdwg.mxu0
        %692 = vmatprep.subr.bf16.mxu0 %v570
        %693 = vmatpush1.bf16.msra.mxu0 %v569
        %694 = vmatprep.subr.bf16.mxu0 %v568
        %695 = vmatpush1.bf16.msra.mxu0 %v567
        %696 = vmatprep.subr.bf16.mxu0 %v566
        %697 = vmatpush1.bf16.msra.mxu0 %v565
        %698 = vmatprep.subr.bf16.mxu0 %v564
        %699 = vmatpush1.bf16.msra.mxu0 %v563
        %700 = vmatprep.subr.bf16.mxu0 %v562
        %701 = vmatpush1.bf16.msra.mxu0 %v561
        %702 = vmatprep.subr.bf16.mxu0 %v560
        %703 = vmatpush1.bf16.msra.mxu0 %v559
        %704 = vmatprep.subr.bf16.mxu0 %v558
        %705 = vmatpush1.bf16.msra.mxu0 %v557
        %706 = vmatprep.subr.bf16.mxu0 %v556
        %707 = vmatpush1.bf16.msra.mxu0 %v555
        %708 = vmatprep.subr.bf16.mxu0 %v586
        %709 = vmatpush2.bf16.msra.mxu0 %v585
        %710 = vmatprep.subr.bf16.mxu0 %v584
        %711 = vmatpush2.bf16.msra.mxu0 %v583
        %712 = vmatprep.subr.bf16.mxu0 %v582
        %713 = vmatpush2.bf16.msra.mxu0 %v581
        %714 = vmatprep.subr.bf16.mxu0 %v580
        %715 = vmatpush2.bf16.msra.mxu0 %v579
        %716 = vmatprep.subr.bf16.mxu0 %v578
        %717 = vmatpush2.bf16.msra.mxu0 %v577
        %718 = vmatprep.subr.bf16.mxu0 %v576
        %719 = vmatpush2.bf16.msra.mxu0 %v575
        %720 = vmatprep.subr.bf16.mxu0 %v574
        %721 = vmatpush2.bf16.msra.mxu0 %v573
        %722 = vmatprep.subr.bf16.mxu0 %v572
        %723 = vmatpush2.bf16.msra.mxu0 %v571
        %724 = vmatprep.mubr.bf16.mxu0 %v254
        %725 = vmatmul.mubr.bf16.gmra.mxu0 %v253
        %v726 = vpop.f32.mrf.mxu0
        %v727 = vadd.f32 %v686, %v726
        %v728 = vpop.f32.mrf.mxu0
        %v729 = vadd.f32 %v688, %v728
        %v730 = vpop.f32.mrf.mxu0
        %v731 = vpop.f32.mrf.mxu0
        %732 = vdwg.mxu0
        %s733 = sld [smem:[#allocation3]]
        %vm734 = vcmp.ge.f32.partialorder %v727, 0.0
        %vm735 = vcmp.ge.f32.partialorder %v729, 0.0
        %v736 = vstv %s733
        %v737 = vmul.f32 %v736, %v727
        %v738 = vmul.f32 %v736, %v729
        %v739 = vsel %vm734, %v727, %v737
        %v740 = vsel %vm735, %v729, %v738
        %741 = vst [vmem:[%s239] sm:$0xff] %v739
        %742 = vst [vmem:[%s239 + $0x8] sm:$0xff] %v740
        %s743 = sand.u32 %s123, 1
        %s744 = scalar_lea.sflag [#allocation6], %s743
        %s745 = sand.u32 %s123, 1
        %s746 = smul.addr %s745, 16
        %s747 = scalar_lea.vmem [#allocation9], %s746
        // Predicated region
        $region41: #{tpu_custom_call.1} parent=31 // pred_check
          %p748 = pneg %p133
        $region42: #{tpu_custom_call.1} parent=31 // pred_check_branch
          %750 = sbr.rel (%p748) target = $region44
        $region43: #{tpu_custom_call.1} parent=31 // pred_region
          %s751 = smul.u32 2, %s28
          %s753 = ssub.s32 256, 256
          %754 = vsyncadd %s744, %s753
          %s755 = smul.addr %s27, 4
          %s756 = sadd.s32 %s751, %s755
          %s757 = smul.addr %s756, 128
          %s758 = scalar_lea.hbm %s4, %s757
          %s760 = sshll.u32 %s747, 4
          %s761 = int_to_ptr.vmem [resolvable:$true] %s760
          %763 = dma.vmem_to_hbm [thread:$0]  %s761, 256, %s758, %s744
        $region44: #{tpu_custom_call.1} parent=31 // pred_fallthru
          _
      $region32: #{tpu_custom_call.1} parent=5 // pred_fallthru
        _
      %p764 = scmp.le.s32.totalorder 2, %s18
      // Predicated region
      $region45: #{tpu_custom_call.1} parent=5 // pred_check
        %p765 = pneg %p764
      $region46: #{tpu_custom_call.1} parent=5 // pred_check_branch
        %767 = sbr.rel (%p765) target = $region48
      $region47: #{tpu_custom_call.1} parent=5 // pred_region
        %s768 = ssub.s32 %s18, 2
        // Predicated region
        $region49: #{tpu_custom_call.1} parent=47 // pred_check
          %p769 = pneg %p139
        $region50: #{tpu_custom_call.1} parent=47 // pred_check_branch
          %771 = sbr.rel (%p769) target = $region52
        $region51: #{tpu_custom_call.1} parent=47 // pred_region
          %s772 = sand.u32 %s124, 1
          %s773 = scalar_lea.sflag [#allocation6], %s772
          %s774 = sand.u32 %s124, 1
          %s775 = smul.addr %s774, 16
          %s776 = scalar_lea.vmem [#allocation9], %s775
          %777 = dma.done %s773, 256
        $region52: #{tpu_custom_call.1} parent=47 // pred_fallthru
          _
      $region48: #{tpu_custom_call.1} parent=5 // pred_fallthru
        _
    $region6: #{tpu_custom_call.1} parent=1 // loop_footer
      %s22 = sadd.s32 1, %s18
    $region7: #{tpu_custom_call.1} parent=1 // loop_footer_branch
      %17 = sbr.rel target = $region3
    $region8: #{tpu_custom_call.1} parent=1 // loop_exit
      _
    %778 = vsyncpa [#allocation5], 1
    %s779 = scalar_lea.sflag [#allocation5], 1
    %780 = vsyncpa %s779, 1
    %781 = vsyncpa [#allocation8], 1
    %s782 = scalar_lea.sflag [#allocation8], 1
    %783 = vsyncpa %s782, 1
    %784 = vsyncpa [#allocation6], 1
    %s785 = scalar_lea.sflag [#allocation6], 1
    %786 = vsyncpa %s785, 1

</llo_original>
